<compile_context>
chip_gen: v6e
topology: v6e:2x2x1
jax: 0.10.0
libtpu: 0.0.40
codegen_flags: <defaults>
</compile_context>

<pallas_src>
import jax
import jax.numpy as jnp
from jax.experimental import pallas as pl
from jax.experimental.pallas import tpu as pltpu


_BLOCK_N_CAP = 8192  # per-step overhead is negligible long before this


def _round_up(x, m):
    return ((x + m - 1) // m) * m


def _vmem_capacity_bytes():
    try:
        return int(pltpu.get_tpu_info().vmem_capacity_bytes)
    except Exception:
        return 64 * 1024 * 1024  # conservative fallback (v7x-sized) -> safe everywhere


def _default_num_row_splits():
    # 2 TensorCores per chip only on v7x; v5e/v6e have one, so a 2-way leading
    # "parallel" axis would just be a serial loop (pure overhead).
    try:
        kind = jax.devices()[0].device_kind.lower()
    except Exception:
        return 1
    return 2 if "7" in kind else 1


def _pick_block_n(n_classes, itemsize, sublane):
    """Largest row tile whose per-step VMEM working set fits ~55% of this chip's VMEM."""
    budget = int(_vmem_capacity_bytes() * 0.55)
    # Per-row VMEM bytes:
    #   2 * C * itemsize : double-buffered logits tile
    #   4 * C * 4        : f32 body temporaries (upcast x, z, exp(z), masked select)
    #   2 * 128 * 4      : double-buffered (block_n, 1) int32 targets tile
    #                      (lane dim pads to 128 in VMEM)
    per_row = 2 * n_classes * itemsize + 4 * n_classes * 4 + 2 * 128 * 4
    block_n = min(_BLOCK_N_CAP, budget // max(1, per_row))
    return int(max(sublane, (block_n // sublane) * sublane))


def _logsoftmax_kl_kernel(out_ref, tgt_ref, loss_ref, z_acc, lse_acc):
    i = pl.program_id(1)

    @pl.when(i == 0)
    def _():
        z_acc[...] = jnp.zeros_like(z_acc)
        lse_acc[...] = jnp.zeros_like(lse_acc)

    x = out_ref[...].astype(jnp.float32)                 # (TN, C)
    t = tgt_ref[...]                                     # (TN, 1) int32
    valid = t >= 0                                       # padded/ragged rows: t == -1

    # Numerically stable log-softmax pieces (full log-probs never materialized).
    m = jnp.max(x, axis=1, keepdims=True)                # (TN, 1)
    z = x - m                                            # (TN, C)
    lse = jnp.log(jnp.sum(jnp.exp(z), axis=1, keepdims=True))   # (TN, 1)

    # sum_i nll_i = sum_i lse_i - sum_i z[i, t_i]; accumulate both halves separately.
    # (TN, 1)-sized work only for the lse half; padded/garbage rows masked out.
    lse_acc[...] += jnp.sum(jnp.where(valid, lse, 0.0), axis=0, keepdims=True)   # (1, 1)

    # Lane-wise scatter of z at each row's target lane: lane c accumulates
    # sum over {rows with t == c} of z[row, c]. Rows with t == -1 match no lane.
    col = jax.lax.broadcasted_iota(jnp.int32, (1, x.shape[1]), 1)                # (1, C)
    z_acc[...] += jnp.sum(jnp.where(col == t, z, 0.0), axis=0, keepdims=True)    # (1, C)

    @pl.when(i == pl.num_programs(1) - 1)
    def _():
        # Single cross-lane reduce, once per split; store the scalar at [0, 0].
        total = jnp.sum(lse_acc[...]) - jnp.sum(z_acc[...])
        lane = jax.lax.broadcasted_iota(jnp.int32, (1, 128), 1)
        loss_ref[0:1, :] = jnp.where(lane == 0, total, 0.0)


def log_softmax_wrapper_loss(outputs, targets, *, block_n=None, num_row_splits=None):
    """outputs: (N, C) float (f32/bf16), targets: (N,) int in [0, C) -> scalar f32 loss."""
    N, C = outputs.shape
    if N == 0:
        # PyTorch would produce 0/0 = NaN here; return 0.0 instead of dividing by zero.
        return jnp.float32(0.0)

    if num_row_splits is None:
        num_row_splits = _default_num_row_splits()

    itemsize = jnp.dtype(outputs.dtype).itemsize
    sublane = 8 * max(1, 4 // itemsize)          # 8 for f32, 16 for bf16
    if block_n is None:
        block_n = _pick_block_n(C, itemsize, sublane)
    # Don't tile past what the input needs.
    rows_per_split = pl.cdiv(N, num_row_splits)
    block_n = max(sublane, min(_round_up(block_n, sublane), _round_up(rows_per_split, sublane)))

    steps = pl.cdiv(N, num_row_splits * block_n)          # inner (reduction) grid extent
    padded_n = num_row_splits * steps * block_n

    # Only the tiny targets column gets padded (-1 matches no class lane); the big
    # logits tensor is streamed un-padded from HBM.
    tgt = targets.astype(jnp.int32).reshape(N, 1)
    if padded_n != N:
        tgt = jnp.pad(tgt, ((0, padded_n - N), (0, 0)), constant_values=-1)

    # Logits blocks beyond the array are clamped to the last valid block; their target
    # rows are all -1, so the duplicated block contributes exactly zero.
    last_blk = pl.cdiv(N, block_n) - 1

    vmem_limit = min(int(_vmem_capacity_bytes() * 0.85), 128 * 1024 * 1024)

    partials = pl.pallas_call(
        _logsoftmax_kl_kernel,
        out_shape=jax.ShapeDtypeStruct((num_row_splits * 8, 128), jnp.float32),
        grid_spec=pltpu.PrefetchScalarGridSpec(
            num_scalar_prefetch=0,
            grid=(num_row_splits, steps),
            in_specs=[
                pl.BlockSpec((block_n, C),
                             lambda p, i: (jnp.minimum(p * steps + i, last_blk), 0)),
                pl.BlockSpec((block_n, 1), lambda p, i: (p * steps + i, 0)),
            ],
            out_specs=pl.BlockSpec((8, 128), lambda p, i: (p, 0)),
            scratch_shapes=[
                pltpu.VMEM((1, C), jnp.float32),   # z-at-target lane accumulator
                pltpu.VMEM((1, 1), jnp.float32),   # lse accumulator
            ],
        ),
        compiler_params=pltpu.CompilerParams(
            # outer axis: independent row splits (megacore on v7x);
            # inner axis: running accumulation into the resident output block.
            dimension_semantics=("parallel", "arbitrary"),
            vmem_limit_bytes=vmem_limit,
        ),
    )(outputs, tgt)

    # Each split's scalar lives at [p*8, 0]; everything else is never read.
    per_split = partials.reshape(num_row_splits, 8, 128)[:, 0, 0]
    return jnp.sum(per_split) / jnp.float32(N)


def _reference_loss(outputs, targets):
    """Pure-JAX reference mirroring the PyTorch forward."""
    C = outputs.shape[1]
    onehot = jax.nn.one_hot(targets, C, dtype=jnp.float32)
    logp = jax.nn.log_softmax(outputs.astype(jnp.float32), axis=1)
    kl = jnp.sum(
        jnp.where(onehot > 0,
                  onehot * (jnp.log(jnp.where(onehot > 0, onehot, 1.0)) - logp),
                  0.0))
    return kl / jnp.sum(onehot)


if __name__ == "__main__":
    key = jax.random.PRNGKey(0)
    k1, k2, k3, k4 = jax.random.split(key, 4)

    # Case 1: small f32, forced tiny tile + 2-way split. Exercises the ragged last
    # block (no logits padding), block-index clamping, and multi-step accumulation.
    N1, C1 = 50, 32
    out1 = jax.random.normal(k1, (N1, C1), dtype=jnp.float32)
    tgt1 = jax.random.randint(k2, (N1,), 0, C1, dtype=jnp.int32)
    loss1 = jax.block_until_ready(
        log_softmax_wrapper_loss(out1, tgt1, block_n=16, num_row_splits=2))
    ref1 = _reference_loss(out1, tgt1)
    assert jnp.allclose(loss1, ref1, rtol=1e-4, atol=1e-4), (loss1, ref1)

    # Case 2: bf16 logits, auto tile / auto split (default VMEM-aware path).
    N2, C2 = 137, 96
    out2 = jax.random.normal(k3, (N2, C2), dtype=jnp.float32).astype(jnp.bfloat16)
    tgt2 = jax.random.randint(k4, (N2,), 0, C2, dtype=jnp.int32)
    loss2 = jax.block_until_ready(log_softmax_wrapper_loss(out2, tgt2))
    ref2 = _reference_loss(out2, tgt2)
    assert jnp.allclose(loss2, ref2, rtol=1e-4, atol=1e-4), (loss2, ref2)

    print("KERNEL_OK")
</pallas_src>

<mosaic_0001>
module attributes {stable_mosaic.version = 11 : i64} {
  func.func @_logsoftmax_kl_kernel(%arg0: i32, %arg1: i32, %arg2: memref<16x32xf32, #tpu.memory_space<vmem>>, %arg3: memref<16x1xi32, #tpu.memory_space<vmem>>, %arg4: memref<8x128xf32, #tpu.memory_space<vmem>>, %arg5: memref<1x32xf32, #tpu.memory_space<vmem>>, %arg6: memref<1x1xf32, #tpu.memory_space<vmem>>) attributes {dimension_semantics = [#tpu.dimension_semantics<parallel>, #tpu.dimension_semantics<arbitrary>], iteration_bounds = array<i64: 2, 2>, scalar_prefetch = 0 : i64, scratch_operands = 2 : i64, tpu.core_type = #tpu.core_type<tc>, window_params = [{transform_indices = @transform_0, window_bounds = array<i64: 16, 32>}, {transform_indices = @transform_1, window_bounds = array<i64: 16, 1>}, {transform_indices = @transform_2, window_bounds = array<i64: 8, 128>}]} {
    %c0_i32 = arith.constant 0 : i32
    %0 = arith.cmpi eq, %arg1, %c0_i32 : i32
    %1 = arith.extui %0 : i1 to i32
    %c0_i32_0 = arith.constant 0 : i32
    %2 = arith.cmpi ne, %1, %c0_i32_0 : i32
    scf.if %2 {
      %cst_19 = arith.constant 0.000000e+00 : f32
      %36 = vector.broadcast %cst_19 : f32 to vector<1x32xf32>
      %c0_20 = arith.constant 0 : index
      %c0_21 = arith.constant 0 : index
      %37 = vector.load %arg5[%c0_20, %c0_21] : memref<1x32xf32, #tpu.memory_space<vmem>>, vector<1x32xf32>
      tpu.vector_store %arg5[%c0_20, %c0_21], %36 {strides = array<i32>} : memref<1x32xf32, #tpu.memory_space<vmem>>, vector<1x32xf32>,
      %cst_22 = arith.constant 0.000000e+00 : f32
      %38 = vector.broadcast %cst_22 : f32 to vector<1x1xf32>
      %c0_23 = arith.constant 0 : index
      %c0_24 = arith.constant 0 : index
      %39 = vector.load %arg6[%c0_23, %c0_24] : memref<1x1xf32, #tpu.memory_space<vmem>>, vector<1x1xf32>
      tpu.vector_store %arg6[%c0_23, %c0_24], %38 {strides = array<i32>} : memref<1x1xf32, #tpu.memory_space<vmem>>, vector<1x1xf32>,
    } else {
    }
    %c0 = arith.constant 0 : index
    %c0_1 = arith.constant 0 : index
    %3 = vector.load %arg2[%c0, %c0_1] : memref<16x32xf32, #tpu.memory_space<vmem>>, vector<16x32xf32>
    %c0_2 = arith.constant 0 : index
    %c0_3 = arith.constant 0 : index
    %4 = vector.load %arg3[%c0_2, %c0_3] : memref<16x1xi32, #tpu.memory_space<vmem>>, vector<16x1xi32>
    %c0_i32_4 = arith.constant 0 : i32
    %5 = vector.broadcast %c0_i32_4 : i32 to vector<16x1xi32>
    %6 = arith.cmpi sge, %4, %5 : vector<16x1xi32>
    %cst = arith.constant dense<0xFF800000> : vector<16xf32>
    %7 = vector.multi_reduction <maximumf>, %3, %cst [1] : vector<16x32xf32> to vector<16xf32>
    %8 = vector.shape_cast %7 : vector<16xf32> to vector<16x1xf32>
    %9 = vector.broadcast %8 : vector<16x1xf32> to vector<16x32xf32>
    %10 = arith.subf %3, %9 : vector<16x32xf32>
    %11 = math.exp %10 : vector<16x32xf32>
    %cst_5 = arith.constant dense<0.000000e+00> : vector<16xf32>
    %12 = vector.multi_reduction <add>, %11, %cst_5 [1] : vector<16x32xf32> to vector<16xf32>
    %13 = vector.shape_cast %12 : vector<16xf32> to vector<16x1xf32>
    %14 = math.log %13 : vector<16x1xf32>
    %c0_6 = arith.constant 0 : index
    %c0_7 = arith.constant 0 : index
    %15 = vector.load %arg6[%c0_6, %c0_7] : memref<1x1xf32, #tpu.memory_space<vmem>>, vector<1x1xf32>
    %cst_8 = arith.constant 0.000000e+00 : f32
    %16 = vector.broadcast %cst_8 : f32 to vector<16x1xf32>
    %17 = arith.select %6, %14, %16 : vector<16x1xi1>, vector<16x1xf32>
    %cst_9 = arith.constant dense<0.000000e+00> : vector<1xf32>
    %18 = vector.multi_reduction <add>, %17, %cst_9 [0] : vector<16x1xf32> to vector<1xf32>
    %19 = vector.shape_cast %18 : vector<1xf32> to vector<1x1xf32>
    %20 = arith.addf %15, %19 : vector<1x1xf32>
    %c0_10 = arith.constant 0 : index
    %c0_11 = arith.constant 0 : index
    %21 = vector.load %arg6[%c0_10, %c0_11] : memref<1x1xf32, #tpu.memory_space<vmem>>, vector<1x1xf32>
    tpu.vector_store %arg6[%c0_10, %c0_11], %20 {strides = array<i32>} : memref<1x1xf32, #tpu.memory_space<vmem>>, vector<1x1xf32>,
    %22 = tpu.iota {dimensions = array<i32: 1>} : vector<1x32xi32>
    %c0_12 = arith.constant 0 : index
    %c0_13 = arith.constant 0 : index
    %23 = vector.load %arg5[%c0_12, %c0_13] : memref<1x32xf32, #tpu.memory_space<vmem>>, vector<1x32xf32>
    %24 = vector.broadcast %22 : vector<1x32xi32> to vector<16x32xi32>
    %25 = vector.broadcast %4 : vector<16x1xi32> to vector<16x32xi32>
    %26 = arith.cmpi eq, %24, %25 : vector<16x32xi32>
    %cst_14 = arith.constant 0.000000e+00 : f32
    %27 = vector.broadcast %cst_14 : f32 to vector<16x32xf32>
    %28 = arith.select %26, %10, %27 : vector<16x32xi1>, vector<16x32xf32>
    %cst_15 = arith.constant dense<0.000000e+00> : vector<32xf32>
    %29 = vector.multi_reduction <add>, %28, %cst_15 [0] : vector<16x32xf32> to vector<32xf32>
    %30 = vector.shape_cast %29 : vector<32xf32> to vector<1x32xf32>
    %31 = arith.addf %23, %30 : vector<1x32xf32>
    %c0_16 = arith.constant 0 : index
    %c0_17 = arith.constant 0 : index
    %32 = vector.load %arg5[%c0_16, %c0_17] : memref<1x32xf32, #tpu.memory_space<vmem>>, vector<1x32xf32>
    tpu.vector_store %arg5[%c0_16, %c0_17], %31 {strides = array<i32>} : memref<1x32xf32, #tpu.memory_space<vmem>>, vector<1x32xf32>,
    %c1_i32 = arith.constant 1 : i32
    %33 = arith.cmpi eq, %arg1, %c1_i32 : i32
    %34 = arith.extui %33 : i1 to i32
    %c0_i32_18 = arith.constant 0 : i32
    %35 = arith.cmpi ne, %34, %c0_i32_18 : i32
    scf.if %35 {
      %c0_19 = arith.constant 0 : index
      %c0_20 = arith.constant 0 : index
      %36 = vector.load %arg6[%c0_19, %c0_20] : memref<1x1xf32, #tpu.memory_space<vmem>>, vector<1x1xf32>
      %37 = vector.shape_cast %36 : vector<1x1xf32> to vector<1x1x1xf32>
      %cst_21 = arith.constant dense<0.000000e+00> : vector<1xf32>
      %38 = vector.multi_reduction <add>, %37, %cst_21 [1, 2] : vector<1x1x1xf32> to vector<1xf32>
      %39 = vector.shape_cast %38 : vector<1xf32> to vector<1x1x1xf32>
      %40 = vector.extract %39[0, 0, 0] : f32 from vector<1x1x1xf32>
      %c0_22 = arith.constant 0 : index
      %c0_23 = arith.constant 0 : index
      %41 = vector.load %arg5[%c0_22, %c0_23] : memref<1x32xf32, #tpu.memory_space<vmem>>, vector<1x32xf32>
      %42 = vector.shape_cast %41 : vector<1x32xf32> to vector<1x1x32xf32>
      %cst_24 = arith.constant dense<0.000000e+00> : vector<1xf32>
      %43 = vector.multi_reduction <add>, %42, %cst_24 [1, 2] : vector<1x1x32xf32> to vector<1xf32>
      %44 = vector.shape_cast %43 : vector<1xf32> to vector<1x1x1xf32>
      %45 = vector.extract %44[0, 0, 0] : f32 from vector<1x1x1xf32>
      %46 = arith.subf %40, %45 : f32
      %47 = tpu.iota {dimensions = array<i32: 1>} : vector<1x128xi32>
      %c0_i32_25 = arith.constant 0 : i32
      %48 = vector.broadcast %c0_i32_25 : i32 to vector<1x128xi32>
      %49 = arith.cmpi eq, %47, %48 : vector<1x128xi32>
      %cst_26 = arith.constant 0.000000e+00 : f32
      %50 = vector.broadcast %46 : f32 to vector<1x128xf32>
      %51 = vector.broadcast %cst_26 : f32 to vector<1x128xf32>
      %52 = arith.select %49, %50, %51 : vector<1x128xi1>, vector<1x128xf32>
      %c0_27 = arith.constant 0 : index
      %c0_28 = arith.constant 0 : index
      %53 = vector.load %arg4[%c0_27, %c0_28] : memref<8x128xf32, #tpu.memory_space<vmem>>, vector<1x128xf32>
      tpu.vector_store %arg4[%c0_27, %c0_28], %52 {strides = array<i32>} : memref<8x128xf32, #tpu.memory_space<vmem>>, vector<1x128xf32>,
    } else {
    }
    return
  }
  func.func @transform_0(%arg0: i32, %arg1: i32) -> (i32, i32) {
    %c2_i32 = arith.constant 2 : i32
    %0 = arith.muli %arg0, %c2_i32 : i32
    %1 = arith.addi %0, %arg1 : i32
    %c3_i32 = arith.constant 3 : i32
    %2 = arith.minsi %1, %c3_i32 : i32
    %c0_i32 = arith.constant 0 : i32
    %c0_i32_0 = arith.constant 0 : i32
    return %2, %c0_i32 : i32, i32
  }
  func.func @transform_1(%arg0: i32, %arg1: i32) -> (i32, i32) {
    %c2_i32 = arith.constant 2 : i32
    %0 = arith.muli %arg0, %c2_i32 : i32
    %1 = arith.addi %0, %arg1 : i32
    %c0_i32 = arith.constant 0 : i32
    %c0_i32_0 = arith.constant 0 : i32
    return %1, %c0_i32 : i32, i32
  }
  func.func @transform_2(%arg0: i32, %arg1: i32) -> (i32, i32) {
    %c0_i32 = arith.constant 0 : i32
    %c0_i32_0 = arith.constant 0 : i32
    return %arg0, %c0_i32 : i32, i32
  }
}

</mosaic_0001>

<llo_original>
// kernel: tpu_custom_call.1
$region0: #{tpu_custom_call.1}
  #allocation0 [shape = 'u32[]', space=smem, size = 0x4, offset = 0x4, fixed_abs, tag = 'smem constant byte address 0x4 - core index']
  #allocation1 [shape = 'u32[144,128]{1,0:T(1,128)}', space=vmem, size = 0x12000, scoped, tag = 'internal scratch']
  #allocation2 [shape = 'f32[1,32]{1,0:T(1,128)}', space=vmem, size = 0x200, scoped, tag = 'scratch operand']
  #allocation3 [shape = 'f32[1,1]{1,0:T(1,128)}', space=vmem, size = 0x200, scoped, tag = 'scratch operand']
  %s0 = inlined_call_operand.vmem [shape: f32[50,32], index: 0, kind: input, shape index: {}]
  %s1 = inlined_call_operand.vmem [shape: s32[64,1], index: 1, kind: input, shape index: {}]
  %s2 = inlined_call_operand.hbm [shape: f32[16,128], index: 2, kind: output, shape index: {}]
  %s3 = sld [smem:[#allocation0]]
  $region49: #{tpu_custom_call.1} parent=0
    _
  %s5 = ssub.s32 1, %s3
  %s6 = scalar_select 0, %s5, %s3
  $region1: #{tpu_custom_call.1} parent=0
    #allocation4 [shape = 'u8[8192]{0}', space=vmem, size = 0x2000, scoped, tag = 'output window, operand 0']
    #allocation5 [shape = 's32[2]{0}', space=sflag, size = 0x8, scoped, tag = 'scoped memory for tpu_custom_call.1']
    %7 = vsyncpa [#allocation5], 0
    %s8 = scalar_lea.sflag [#allocation5], 1
    %9 = vsyncpa %s8, 0
    loop: start=0, step=1, limit=6
    $region2: #{tpu_custom_call.1} parent=1 // loop_pre_header
      _
    $region3: #{tpu_custom_call.1} parent=1 // loop_header
      %s11 = sphi 0, %s15
      %p12 = scmp.ge.s32.totalorder %s11, 6
      %s18 = sphi 0, %s30
      %s19 = sphi 0, %s26
      %s20 = sphi 0, %s18
      %s21 = sphi 0, %s19
      %s22 = sphi 0, %s20
      %s23 = sphi 0, %s21
      %s41 = sphi 0, %s43
      %s44 = sphi 0, %s41
      %s45 = sphi 0, %s44
      %s61 = sphi 0, %s45
      %s71 = sphi 0, %s73
      %s74 = sphi 0, %s71
      %s75 = sphi 0, %s74
      %s91 = sphi 0, %s75
      %s97 = sphi 0, %s99
      %s100 = sphi 0, %s97
      %s101 = sphi 0, %s100
      %s117 = sphi 0, %s101
    $region4: #{tpu_custom_call.1} parent=1 // loop_header_branch
      %14 = sbr.rel (%p12) target = $region8
    $region5: #{tpu_custom_call.1} parent=1 // loop_body
      %s16 = ssub.s32 %s11, 1
      %s17 = ssub.s32 %s11, 2
      %s24 = sadd.s32 1, %s19
      %p25 = scmp.ge.s32.totalorder %s24, 2
      %s26 = scalar_select %p25, 0, %s24
      %s27 = sadd.s32 1, %s18
      %s28 = scalar_select %p25, %s27, %s18
      %p29 = scmp.ge.s32.totalorder %s28, 2
      %s30 = scalar_select %p29, 0, %s28
      %s31 = smul.u32 %s18, 2
      %s32 = sadd.s32 %s31, %s19
      %p33 = scmp.lt.s32.totalorder %s32, 3
      %s34 = scalar_select %p33, %s32, 3
      %s35 = smul.u32 %s30, 2
      %s36 = sadd.s32 %s35, %s26
      %p37 = scmp.lt.s32.totalorder %s36, 3
      %s38 = scalar_select %p37, %s36, 3
      %s39 = ssub.s32 %s34, %s38
      %p40 = scmp.eq.s32.totalorder %s39, 0
      %s42 = sadd.s32 %s41, 1
      %s43 = scalar_select %p40, %s41, %s42
      %p46 = pneg %p40
      %p47 = scmp.eq.s32.totalorder %s11, 3
      %p48 = por %p46, %p47
      %p49 = scmp.ne.s32.totalorder %s41, %s44
      %p50 = scmp.eq.s32.totalorder %s11, 0
      %p51 = por %p49, %p50
      %p52 = scmp.ne.s32.totalorder %s41, %s44
      %p53 = scmp.eq.s32.totalorder %s16, 3
      %p54 = por %p52, %p53
      %p55 = scmp.ne.s32.totalorder %s44, %s45
      %p56 = scmp.eq.s32.totalorder %s16, 0
      %p57 = por %p55, %p56
      %p58 = scmp.ne.s32.totalorder %s44, %s45
      %p59 = scmp.eq.s32.totalorder %s17, 3
      %p60 = por %p58, %p59
      %p62 = scmp.ne.s32.totalorder %s45, %s61
      %p63 = scmp.eq.s32.totalorder %s17, 0
      %p64 = por %p62, %p63
      %s65 = smul.u32 %s18, 2
      %s66 = sadd.s32 %s65, %s19
      %s67 = smul.u32 %s30, 2
      %s68 = sadd.s32 %s67, %s26
      %s69 = ssub.s32 %s66, %s68
      %p70 = scmp.eq.s32.totalorder %s69, 0
      %s72 = sadd.s32 %s71, 1
      %s73 = scalar_select %p70, %s71, %s72
      %p76 = pneg %p70
      %p77 = scmp.eq.s32.totalorder %s11, 3
      %p78 = por %p76, %p77
      %p79 = scmp.ne.s32.totalorder %s71, %s74
      %p80 = scmp.eq.s32.totalorder %s11, 0
      %p81 = por %p79, %p80
      %p82 = scmp.ne.s32.totalorder %s71, %s74
      %p83 = scmp.eq.s32.totalorder %s16, 3
      %p84 = por %p82, %p83
      %p85 = scmp.ne.s32.totalorder %s74, %s75
      %p86 = scmp.eq.s32.totalorder %s16, 0
      %p87 = por %p85, %p86
      %p88 = scmp.ne.s32.totalorder %s74, %s75
      %p89 = scmp.eq.s32.totalorder %s17, 3
      %p90 = por %p88, %p89
      %p92 = scmp.ne.s32.totalorder %s75, %s91
      %p93 = scmp.eq.s32.totalorder %s17, 0
      %p94 = por %p92, %p93
      %s95 = ssub.s32 %s18, %s30
      %p96 = scmp.eq.s32.totalorder %s95, 0
      %s98 = sadd.s32 %s97, 1
      %s99 = scalar_select %p96, %s97, %s98
      %p102 = pneg %p96
      %p103 = scmp.eq.s32.totalorder %s11, 3
      %p104 = por %p102, %p103
      %p105 = scmp.ne.s32.totalorder %s97, %s100
      %p106 = scmp.eq.s32.totalorder %s11, 0
      %p107 = por %p105, %p106
      %p108 = scmp.ne.s32.totalorder %s97, %s100
      %p109 = scmp.eq.s32.totalorder %s16, 3
      %p110 = por %p108, %p109
      %p111 = scmp.ne.s32.totalorder %s100, %s101
      %p112 = scmp.eq.s32.totalorder %s16, 0
      %p113 = por %p111, %p112
      %p114 = scmp.ne.s32.totalorder %s100, %s101
      %p115 = scmp.eq.s32.totalorder %s17, 3
      %p116 = por %p114, %p115
      %p118 = scmp.ne.s32.totalorder %s101, %s117
      %p119 = scmp.eq.s32.totalorder %s17, 0
      %p120 = por %p118, %p119
      %p121 = scmp.le.s32.totalorder 1, %s11
      %p122 = scmp.lt.s32.totalorder %s11, 5
      %p123 = pnand %p121, %p122
      %p124 = pneg %p123
      // Predicated region
      $region9: #{tpu_custom_call.1} parent=5 // pred_check
        _
      $region10: #{tpu_custom_call.1} parent=5 // pred_check_branch
        %126 = sbr.rel (%p123) target = $region12
      $region11: #{tpu_custom_call.1} parent=5 // pred_region
        %s127 = ssub.s32 %s11, 1
      $region12: #{tpu_custom_call.1} parent=5 // pred_fallthru
        _
      %p128 = scmp.lt.s32.totalorder %s11, 4
      // Predicated region
      $region13: #{tpu_custom_call.1} parent=5 // pred_check
        %p129 = pneg %p128
      $region14: #{tpu_custom_call.1} parent=5 // pred_check_branch
        %131 = sbr.rel (%p129) target = $region16
      $region15: #{tpu_custom_call.1} parent=5 // pred_region
        // Predicated region
        $region17: #{tpu_custom_call.1} parent=15 // pred_check
          %p132 = pneg %p51
        $region18: #{tpu_custom_call.1} parent=15 // pred_check_branch
          %134 = sbr.rel (%p132) target = $region20
        $region19: #{tpu_custom_call.1} parent=15 // pred_region
          %s135 = smul.u32 %s18, 2
          %s136 = sadd.s32 %s135, %s19
          %p137 = scmp.lt.s32.totalorder %s136, 3
          %s138 = scalar_select %p137, %s136, 3
          %s139 = smul.u32 2, %s138
          %s140 = ssub.s32 7, %s139
          %p141 = scmp.lt.s32.totalorder %s140, 2
          %s142 = scalar_select %p141, %s140, 2
          %s143 = smul.u32 128, %s142
          %p144 = scmp.lt.s32.totalorder %s139, 6
          %s145 = scalar_select %p144, %s139, 6
          %s146 = smul.addr %s145, 8
          %s147 = scalar_lea.vmem %s0, %s146
          %s148 = smul.u32 %s18, 2
          %s149 = sadd.s32 %s148, %s19
          %p150 = scmp.lt.s32.totalorder %s149, 3
          %s151 = scalar_select %p150, %s149, 3
          %s152 = smul.u32 2, %s151
          %s153 = ssub.s32 7, %s152
          %p154 = scmp.lt.s32.totalorder %s153, 2
          %s155 = scalar_select %p154, %s153, 2
          %s156 = smul.u32 128, %s155
        $region20: #{tpu_custom_call.1} parent=15 // pred_fallthru
          _
        // Predicated region
        $region21: #{tpu_custom_call.1} parent=15 // pred_check
          %p157 = pneg %p81
        $region22: #{tpu_custom_call.1} parent=15 // pred_check_branch
          %159 = sbr.rel (%p157) target = $region24
        $region23: #{tpu_custom_call.1} parent=15 // pred_region
          %s160 = smul.u32 %s18, 2
          %s161 = sadd.s32 %s160, %s19
          %s162 = smul.u32 2, %s161
          %p163 = scmp.lt.s32.totalorder %s162, 7
          %s164 = scalar_select %p163, %s162, 7
          %s165 = smul.addr %s164, 8
          %s166 = scalar_lea.vmem %s1, %s165
          %s167 = smul.u32 %s18, 2
          %s168 = sadd.s32 %s167, %s19
          %s169 = smul.u32 2, %s168
        $region24: #{tpu_custom_call.1} parent=15 // pred_fallthru
          _
      $region16: #{tpu_custom_call.1} parent=5 // pred_fallthru
        _
      %p170 = scmp.le.s32.totalorder 1, %s11
      %p171 = scmp.lt.s32.totalorder %s11, 5
      %p172 = pnand %p170, %p171
      %p173 = pneg %p172
      // Predicated region
      $region25: #{tpu_custom_call.1} parent=5 // pred_check
        _
      $region26: #{tpu_custom_call.1} parent=5 // pred_check_branch
        %175 = sbr.rel (%p172) target = $region28
      $region27: #{tpu_custom_call.1} parent=5 // pred_region
        %s176 = ssub.s32 %s11, 1
        %s177 = smul.u32 %s20, 2
        %s178 = sadd.s32 %s177, %s21
        %p179 = scmp.lt.s32.totalorder %s178, 3
        %s180 = scalar_select %p179, %s178, 3
        %s181 = smul.u32 2, %s180
        %s182 = ssub.s32 7, %s181
        %p183 = scmp.lt.s32.totalorder %s182, 2
        %s184 = scalar_select %p183, %s182, 2
        %s185 = smul.u32 128, %s184
        %p186 = scmp.lt.s32.totalorder %s181, 6
        %s187 = scalar_select %p186, %s181, 6
        %s188 = smul.addr %s187, 8
        %s189 = scalar_lea.vmem %s0, %s188
        %p190 = pneg %p57
        %p191 = pneg %p54
        %s192 = smul.u32 %s20, 2
        %s193 = sadd.s32 %s192, %s21
        %s194 = smul.u32 2, %s193
        %p195 = scmp.lt.s32.totalorder %s194, 7
        %s196 = scalar_select %p195, %s194, 7
        %s197 = smul.addr %s196, 8
        %s198 = scalar_lea.vmem %s1, %s197
        %p199 = pneg %p87
        %p200 = pneg %p84
        %p201 = pneg %p113
        %p202 = pneg %p110
        %s203 = sand.u32 %s100, 1
        %s204 = scalar_lea.sflag [#allocation5], %s203
        %s205 = sand.u32 %s100, 1
        %s206 = smul.addr %s205, 8
        %s207 = scalar_lea.vmem [#allocation4], %s206
        %s208 = smul.u32 %s20, 2
        %s209 = sadd.s32 %s208, %s21
        %p210 = scmp.lt.s32.totalorder %s209, 3
        %s211 = scalar_select %p210, %s209, 3
        %s212 = smul.u32 2, %s211
        %s213 = ssub.s32 7, %s212
        %p214 = scmp.lt.s32.totalorder %s213, 2
        %s215 = scalar_select %p214, %s213, 2
        %s216 = smul.u32 128, %s215
        %p217 = scmp.lt.s32.totalorder %s212, 6
        %s218 = scalar_select %p217, %s212, 6
        %s219 = smul.addr %s218, 8
        %s220 = scalar_lea.vmem %s0, %s219
        %s221 = smul.u32 %s20, 2
        %s222 = sadd.s32 %s221, %s21
        %p223 = scmp.lt.s32.totalorder %s222, 3
        %s224 = scalar_select %p223, %s222, 3
        %s225 = smul.u32 2, %s224
        %s226 = ssub.s32 7, %s225
        %p227 = scmp.lt.s32.totalorder %s226, 2
        %s228 = scalar_select %p227, %s226, 2
        %s229 = smul.u32 128, %s228
        %s230 = smul.u32 %s20, 2
        %s231 = sadd.s32 %s230, %s21
        %s232 = smul.u32 2, %s231
        %p233 = scmp.lt.s32.totalorder %s232, 7
        %s234 = scalar_select %p233, %s232, 7
        %s235 = smul.addr %s234, 8
        %s236 = scalar_lea.vmem %s1, %s235
        %s237 = smul.u32 %s20, 2
        %s238 = sadd.s32 %s237, %s21
        %s239 = smul.u32 2, %s238
        %p240 = scmp.eq.s32.totalorder %s21, 0
        // Predicated region
        $region29: #{tpu_custom_call.1} parent=27 // pred_check
          %p241 = pneg %p240
        $region30: #{tpu_custom_call.1} parent=27 // pred_check_branch
          %243 = sbr.rel (%p241) target = $region32
        $region31: #{tpu_custom_call.1} parent=27 // pred_region
          %vm244 = vcmask 253952
          %245 = vst.msk [vmem:[#allocation2] sm:$0x1] %vm244, 0.0
          %vm246 = vcmask 0
          %247 = vst.msk [vmem:[#allocation3] sm:$0x1] %vm246, 0.0
        $region32: #{tpu_custom_call.1} parent=27 // pred_fallthru
          _
        %v248 = vld [vmem:[%s220] sm:$0xff]
        %v249 = vld [vmem:[%s220 + $0x8] sm:$0xff]
        %v250 = vld [vmem:[%s236] sm:$0xff]
        %v251 = vld [vmem:[%s236 + $0x8] sm:$0xff]
        %vm252 = vcmp.ge.s32.totalorder %v250, 0
        %vm253 = vcmp.ge.s32.totalorder %v251, 0
        %vm254 = vcmask 261120
        %v255 = vsel %vm254, %v248, -inf
        %256 = vmax.xlane.f32.xlu0 %v255
        %v257 = vpop.xlane.xlu0 %256
        %v258 = vsel %vm254, %v249, -inf
        %259 = vmax.xlane.f32.xlu0 %v258
        %v260 = vpop.xlane.xlu0 %259
        %v261 = vsub.f32 %v248, %v257
        %v262 = vsub.f32 %v249, %v260
        %v263 = vmul.f32 %v261, 1.442695
        %v264 = vpow.pop %v263
        %v265 = vmul.f32 %v262, 1.442695
        %v266 = vpow.pop %v265
        %v267 = vsel %vm254, %v264, 0.0
        %268 = vadd.xlane.f32.xlu0 %v267
        %v269 = vpop.xlane.xlu0 %268
        %v270 = vsel %vm254, %v266, 0.0
        %271 = vadd.xlane.f32.xlu0 %v270
        %v272 = vpop.xlane.xlu0 %271
        %v273 = vlog2.pop %v269
        %v274 = vmul.f32 %v273, 0.6931472
        %v275 = vlog2.pop %v272
        %v276 = vmul.f32 %v275, 0.6931472
        %v277 = vld [vmem:[#allocation3] sm:$0x1]
        %v278 = vsel %vm252, %v274, 0.0
        %v279 = vsel %vm253, %v276, 0.0
        %vm280 = vcmask 7168
        %v281 = vsel %vm280, %v278, 0.0
        %v282 = vsel %vm280, %v279, 0.0
        %v283 = vadd.f32 %v281, %v282
        %v284 = vrot.slane %v283, 4
        %v285 = vadd.f32 %v283, %v284
        %v286 = vrot.slane %v285, 2
        %v287 = vadd.f32 %v285, %v286
        %v288 = vrot.slane %v287, 1
        %v289 = vadd.f32 %v287, %v288
        %v290 = vadd.f32 %v277, %v289
        %vm291 = vcmask 0
        %292 = vst.msk [vmem:[#allocation3] sm:$0x1] %vm291, %v290
        %v293 = vlaneseq
        %v294 = vand.u32 %v293, 127
        %v295 = vld [vmem:[#allocation2] sm:$0x1]
        %296 = vset.pattern.permute.xlu0 0
        %297 = vperm.xlu0 %296, %v250
        %v298 = vpop.permute.xlu0 %297
        %299 = vset.pattern.permute.xlu0 0
        %300 = vperm.xlu0 %299, %v251
        %v301 = vpop.permute.xlu0 %300
        %vm302 = vcmp.eq.s32.totalorder %v294, %v298
        %vm303 = vcmp.eq.s32.totalorder %v294, %v301
        %v304 = vsel %vm302, %v261, 0.0
        %v305 = vsel %vm303, %v262, 0.0
        %v306 = vsel %vm254, %v304, 0.0
        %v307 = vsel %vm254, %v305, 0.0
        %v308 = vadd.f32 %v306, %v307
        %v309 = vrot.slane %v308, 4
        %v310 = vadd.f32 %v308, %v309
        %v311 = vrot.slane %v310, 2
        %v312 = vadd.f32 %v310, %v311
        %v313 = vrot.slane %v312, 1
        %v314 = vadd.f32 %v312, %v313
        %v315 = vadd.f32 %v295, %v314
        %vm316 = vcmask 253952
        %317 = vst.msk [vmem:[#allocation2] sm:$0x1] %vm316, %v315
        %p318 = scmp.eq.s32.totalorder %s21, 1
        // Predicated region
        $region33: #{tpu_custom_call.1} parent=27 // pred_check
          %p319 = pneg %p318
        $region34: #{tpu_custom_call.1} parent=27 // pred_check_branch
          %321 = sbr.rel (%p319) target = $region36
        $region35: #{tpu_custom_call.1} parent=27 // pred_region
          %v322 = vld [vmem:[#allocation3] sm:$0x1]
          %v323 = vadd.f32 %v322, 0.0
          %s324 = vtos %v323
          %v325 = vld [vmem:[#allocation2] sm:$0x1]
          %v326 = vsel %vm316, %v325, 0.0
          %327 = vadd.xlane.f32.xlu0 %v326
          %v328 = vpop.xlane.xlu0 %327
          %v329 = vrot.slane %v328, 4
          %v330 = vadd.f32 %v328, %v329
          %v331 = vrot.slane %v330, 2
          %v332 = vadd.f32 %v330, %v331
          %v333 = vrot.slane %v332, 1
          %v334 = vadd.f32 %v332, %v333
          %s335 = vtos %v334
          %s336 = ssub.f32 %s324, %s335
          %vm337 = vcmp.eq.s32.totalorder %v294, 0
          %v338 = vstv %s336
          %v339 = vsel %vm337, %v338, 0.0
          %340 = vst [vmem:[%s207] sm:$0x1] %v339
        $region36: #{tpu_custom_call.1} parent=27 // pred_fallthru
          _
        %s341 = sand.u32 %s100, 1
        %s342 = scalar_lea.sflag [#allocation5], %s341
        %s343 = sand.u32 %s100, 1
        %s344 = smul.addr %s343, 8
        %s345 = scalar_lea.vmem [#allocation4], %s344
        // Predicated region
        $region37: #{tpu_custom_call.1} parent=27 // pred_check
          %p346 = pneg %p110
        $region38: #{tpu_custom_call.1} parent=27 // pred_check_branch
          %348 = sbr.rel (%p346) target = $region40
        $region39: #{tpu_custom_call.1} parent=27 // pred_region
          %s350 = ssub.s32 128, 128
          %351 = vsyncadd %s342, %s350
          %s352 = smul.addr %s20, 128
          %s353 = scalar_lea.hbm %s2, %s352
          %s355 = sshll.u32 %s345, 4
          %s356 = int_to_ptr.vmem [resolvable:$true] %s355
          %358 = dma.vmem_to_hbm [thread:$0]  %s356, 128, %s353, %s342
        $region40: #{tpu_custom_call.1} parent=27 // pred_fallthru
          _
      $region28: #{tpu_custom_call.1} parent=5 // pred_fallthru
        _
      %p359 = scmp.le.s32.totalorder 2, %s11
      // Predicated region
      $region41: #{tpu_custom_call.1} parent=5 // pred_check
        %p360 = pneg %p359
      $region42: #{tpu_custom_call.1} parent=5 // pred_check_branch
        %362 = sbr.rel (%p360) target = $region44
      $region43: #{tpu_custom_call.1} parent=5 // pred_region
        %s363 = ssub.s32 %s11, 2
        // Predicated region
        $region45: #{tpu_custom_call.1} parent=43 // pred_check
          %p364 = pneg %p116
        $region46: #{tpu_custom_call.1} parent=43 // pred_check_branch
          %366 = sbr.rel (%p364) target = $region48
        $region47: #{tpu_custom_call.1} parent=43 // pred_region
          %s367 = sand.u32 %s101, 1
          %s368 = scalar_lea.sflag [#allocation5], %s367
          %s369 = sand.u32 %s101, 1
          %s370 = smul.addr %s369, 8
          %s371 = scalar_lea.vmem [#allocation4], %s370
          %372 = dma.done %s368, 128
        $region48: #{tpu_custom_call.1} parent=43 // pred_fallthru
          _
      $region44: #{tpu_custom_call.1} parent=5 // pred_fallthru
        _
    $region6: #{tpu_custom_call.1} parent=1 // loop_footer
      %s15 = sadd.s32 1, %s11
    $region7: #{tpu_custom_call.1} parent=1 // loop_footer_branch
      %10 = sbr.rel target = $region3
    $region8: #{tpu_custom_call.1} parent=1 // loop_exit
      _
    %373 = vsyncpa [#allocation5], 1
    %s374 = scalar_lea.sflag [#allocation5], 1
    %375 = vsyncpa %s374, 1

</llo_original>
